<compile_context>
chip_gen: v7x
topology: tpu7x:2x2x1
jax: 0.10.0
libtpu: 0.0.40
codegen_flags: <defaults>
</compile_context>

<pallas_src>
import functools

import jax
import jax.numpy as jnp
from jax.experimental import pallas as pl
from jax.experimental.pallas import tpu as pltpu


# ----------------------------------------------------------------------------
# Pallas kernel: one mixup-GCN layer (aggregate over both graphs, mix, project)
# ----------------------------------------------------------------------------
def _mixup_layer_kernel(lam_ref, a2_ref, h_ref, bias_ref, wn_ref, bn_ref, o_ref):
    """Per row tile:
         z   = relu(A_rw[tile]   @ H + bias)
         z_b = relu(A_b_rw[tile] @ H + bias)
         mix = lam * z + (1 - lam) * z_b
         out = mix @ W_next + b_next     (W_next = next conv weight or classifier)
    rw_lmda is already folded into A_rw / A_b_rw.
    """
    lam = lam_ref[0]
    one_m = 1.0 - lam
    tm = o_ref.shape[0]

    h = h_ref[...]                       # (N_pad, HID) bf16, same block every step
    bias = bias_ref[...]                 # (1, HID) f32, loaded once, reused twice

    a2 = a2_ref[...]                     # (2, TM, N_pad) bf16: [A_rw, A_b_rw] tiles
    a_cat = a2.reshape(2 * tm, a2.shape[-1])   # layout-free merge of leading dim
    # One long MXU pass for both adjacency branches (single RHS push per layer).
    zz = jnp.dot(a_cat, h, preferred_element_type=jnp.float32)   # (2*TM, HID) f32
    z = jnp.maximum(zz[:tm] + bias, 0.0)
    zb = jnp.maximum(zz[tm:] + bias, 0.0)
    mix = lam * z + one_m * zb

    # TODO(synk): F.dropout(p=0.1) omitted (eval mode / identity).
    out = jnp.dot(mix.astype(wn_ref.dtype), wn_ref[...],
                  preferred_element_type=jnp.float32) + bn_ref[...]
    o_ref[...] = out.astype(o_ref.dtype)


# ----------------------------------------------------------------------------
# Wrapper helpers
# ----------------------------------------------------------------------------
def _round_up(v, m):
    return ((v + m - 1) // m) * m


def _pick_vmem_limit():
    """Per-generation scoped-VMEM budget (v7x ~56 MiB, v6e/v5e capped at 100 MiB)."""
    try:
        cap = int(pltpu.get_tpu_info().vmem_capacity_bytes)
    except Exception:
        cap = 64 << 20                    # conservative: v7x-class physical VMEM
    return min(cap - (8 << 20), 100 << 20)


def _pick_tiles(n, vmem_limit):
    """Largest row tile whose double-buffered (2, TM, N_pad) bf16 A-stream fits
    roughly half of the VMEM budget; target TM around 512."""
    n_pad = _round_up(max(n, 8), 128)
    row_bytes = 2 * 2 * n_pad * 2         # 2 adjacency planes * 2 buffers * bf16
    tm_cap = max(8, (vmem_limit // 2) // row_bytes)
    tm = 512
    while tm > 8 and tm > tm_cap:
        tm //= 2
    if n_pad <= tm:
        tm = n_pad
    else:
        n_pad = _round_up(n_pad, tm)
    return tm, n_pad


def _gcn_norm_scatter(a, plane, edge_index, edge_weight, num_nodes, rw_lmda):
    """Scatter rw_lmda * D^{-1/2}(A + I)D^{-1/2} into a[plane]; A[dst, src] so
    A @ h aggregates incoming edges."""
    src, dst = edge_index[0], edge_index[1]
    loop = jnp.arange(num_nodes, dtype=src.dtype)
    s = jnp.concatenate([src, loop])
    d = jnp.concatenate([dst, loop])
    w = jnp.concatenate([edge_weight, jnp.ones((num_nodes,), edge_weight.dtype)])
    deg = jnp.zeros((num_nodes,), w.dtype).at[d].add(w)
    dinv = jnp.where(deg > 0, jax.lax.rsqrt(deg), 0.0)
    norm = dinv[s] * w * dinv[d] * rw_lmda          # rw_lmda folded here
    return a.at[plane, d, s].add(norm)


def build_stacked_adj(edge_index, edge_index_b, edge_weight, num_nodes, n_pad,
                      rw_lmda, dtype=jnp.bfloat16):
    """(2, n_pad, n_pad) stacked, rw-scaled, normalized adjacencies in bf16."""
    a = jnp.zeros((2, n_pad, n_pad), jnp.float32)
    a = _gcn_norm_scatter(a, 0, edge_index, edge_weight, num_nodes, rw_lmda)
    a = _gcn_norm_scatter(a, 1, edge_index_b, edge_weight, num_nodes, rw_lmda)
    return a.astype(dtype)


# ----------------------------------------------------------------------------
# Forward
# ----------------------------------------------------------------------------
def mixup_base_forward(params, x, edge_index, edge_index_b, lam,
                       id_new_value_old, edge_weight, *, rw_lmda=0.8):
    """Pallas implementation of MixupBase.forward (num_layers=2, eval mode)."""
    w0, b0, w1, b1, wc, bc = params
    n, _ = x.shape
    hid = w0.shape[1]
    c = wc.shape[1]

    vmem_limit = _pick_vmem_limit()
    tm, n_pad = _pick_tiles(n, vmem_limit)
    grid = (n_pad // tm,)

    lam = jnp.asarray(lam, jnp.float32)
    lam_arr = lam.reshape((1,))

    # Stacked dense adjacencies (rw folded, bf16).
    a2 = build_stacked_adj(edge_index, edge_index_b, edge_weight, n, n_pad, rw_lmda)

    # Input mixup + layer-1 projection (tiny O(N*in*hid) matmul; done in XLA).
    x_mix = lam * x + (1.0 - lam) * jnp.take(x, id_new_value_old, axis=0)
    h0 = x_mix @ w0                                        # (n, hid) f32
    h0_p = jnp.zeros((n_pad, hid), jnp.bfloat16).at[:n].set(h0.astype(jnp.bfloat16))

    # Lane-pad classifier so the final store is >=128 lanes wide (dense vst).
    c_pad = _round_up(c, 128)
    wc_p = jnp.zeros((hid, c_pad), jnp.bfloat16).at[:, :c].set(wc.astype(jnp.bfloat16))
    bc_p = jnp.zeros((1, c_pad), jnp.float32).at[:, :c].set(bc)
    w1_bf = w1.astype(jnp.bfloat16)
    zero_bias = jnp.zeros((1, hid), jnp.float32)

    smem = pl.BlockSpec(memory_space=pltpu.MemorySpace.SMEM)
    cparams = pltpu.CompilerParams(dimension_semantics=("parallel",),
                                   vmem_limit_bytes=int(vmem_limit))

    def layer_call(h_prev, bias, w_next, b_next, out_cols, out_dtype):
        return pl.pallas_call(
            _mixup_layer_kernel,
            out_shape=jax.ShapeDtypeStruct((n_pad, out_cols), out_dtype),
            grid=grid,
            in_specs=[
                smem,                                                    # lam
                pl.BlockSpec((2, tm, n_pad), lambda i: (0, i, 0)),       # A / A_b tile
                pl.BlockSpec((n_pad, hid), lambda i: (0, 0)),            # H (resident)
                pl.BlockSpec((1, hid), lambda i: (0, 0)),                # layer bias
                pl.BlockSpec(w_next.shape, lambda i: (0, 0)),            # next weight
                pl.BlockSpec(b_next.shape, lambda i: (0, 0)),            # next bias
            ],
            out_specs=pl.BlockSpec((tm, out_cols), lambda i: (i, 0)),
            compiler_params=cparams,
        )(lam_arr, a2, h_prev, bias, w_next, b_next)

    # Layer 1: mix + project with W1  ->  H1 (bf16, the only extra HBM round trip).
    h1 = layer_call(h0_p, b0, w1_bf, zero_bias, hid, jnp.bfloat16)
    # Layer 2 + classifier: mix + project with Wc, lane-dense f32 logits.
    logits_pad = layer_call(h1, b1, wc_p, bc_p, c_pad, jnp.float32)

    return logits_pad[:n, :c]


# ----------------------------------------------------------------------------
# References (pure JAX) for correctness checking
# ----------------------------------------------------------------------------
def _gcn_norm_dense_f32(edge_index, edge_weight, num_nodes):
    a = jnp.zeros((1, num_nodes, num_nodes), jnp.float32)
    return _gcn_norm_scatter(a, 0, edge_index, edge_weight, num_nodes, 1.0)[0]


def reference_forward(params, x, edge_index, edge_index_b, lam,
                      id_new_value_old, edge_weight, *, rw_lmda=0.8):
    """Full-f32 reference of the same math."""
    w0, b0, w1, b1, wc, bc = params
    n = x.shape[0]
    a = _gcn_norm_dense_f32(edge_index, edge_weight, n)
    ab = _gcn_norm_dense_f32(edge_index_b, edge_weight, n)
    conv = lambda adj, xb, w, b: rw_lmda * (adj @ (xb @ w)) + b
    relu = lambda t: jnp.maximum(t, 0.0)

    x_mix = lam * x + (1.0 - lam) * x[id_new_value_old]
    x1_mix = lam * relu(conv(a, x_mix, w0, b0)) + (1.0 - lam) * relu(conv(ab, x_mix, w0, b0))
    x2_mix = lam * relu(conv(a, x1_mix, w1, b1)) + (1.0 - lam) * relu(conv(ab, x1_mix, w1, b1))
    return x2_mix @ wc + bc


def reference_forward_bf16(params, x, edge_index, edge_index_b, lam,
                           id_new_value_old, edge_weight, *, rw_lmda=0.8):
    """Reference mirroring the kernel's bf16 casts (f32 accumulation) — used for
    a tight wiring check."""
    w0, b0, w1, b1, wc, bc = params
    n = x.shape[0]
    bf = lambda t: t.astype(jnp.bfloat16).astype(jnp.float32)
    relu = lambda t: jnp.maximum(t, 0.0)

    a = bf(rw_lmda * _gcn_norm_dense_f32(edge_index, edge_weight, n))
    ab = bf(rw_lmda * _gcn_norm_dense_f32(edge_index_b, edge_weight, n))

    x_mix = lam * x + (1.0 - lam) * x[id_new_value_old]
    h0 = bf(x_mix @ w0)
    x1_mix = lam * relu(a @ h0 + b0) + (1.0 - lam) * relu(ab @ h0 + b0)
    h1 = bf(bf(x1_mix) @ bf(w1))
    x2_mix = lam * relu(a @ h1 + b1) + (1.0 - lam) * relu(ab @ h1 + b1)
    return bf(x2_mix) @ bf(wc) + bc


# ----------------------------------------------------------------------------
if __name__ == "__main__":
    N = 128          # nodes
    E = 512          # edges
    IN_DIM = 16
    HID_DIM = 32
    NUM_CLASSES = 8
    RW_LMDA = 0.8
    LAM = 0.7

    key = jax.random.PRNGKey(0)
    ks = jax.random.split(key, 10)

    def glorot(k, fan_in, fan_out):
        lim = (6.0 / (fan_in + fan_out)) ** 0.5
        return jax.random.uniform(k, (fan_in, fan_out), jnp.float32, -lim, lim)

    w0 = glorot(ks[0], IN_DIM, HID_DIM)
    b0 = jnp.zeros((1, HID_DIM), jnp.float32)
    w1 = glorot(ks[1], HID_DIM, HID_DIM)
    b1 = jnp.zeros((1, HID_DIM), jnp.float32)
    wc = glorot(ks[2], HID_DIM, NUM_CLASSES)
    bc = jax.random.uniform(ks[3], (1, NUM_CLASSES), jnp.float32, -0.1, 0.1)
    params = (w0, b0, w1, b1, wc, bc)

    src = jax.random.randint(ks[4], (E,), 0, N, dtype=jnp.int32)
    dst = jax.random.randint(ks[5], (E,), 0, N, dtype=jnp.int32)
    edge_index = jnp.stack([src, dst], axis=0)
    edge_weight = jax.random.uniform(ks[6], (E,), jnp.float32, 0.5, 1.5)
    id_new_value_old = jax.random.permutation(ks[7], jnp.arange(N, dtype=jnp.int32))
    edge_index_b = id_new_value_old[edge_index]            # permuted ("mixed") graph
    x = jax.random.normal(ks[8], (N, IN_DIM), jnp.float32)

    run = functools.partial(mixup_base_forward, rw_lmda=RW_LMDA)
    out = jax.block_until_ready(
        run(params, x, edge_index, edge_index_b, LAM, id_new_value_old, edge_weight))

    ref32 = jax.block_until_ready(reference_forward(
        params, x, edge_index, edge_index_b, LAM, id_new_value_old, edge_weight,
        rw_lmda=RW_LMDA))
    ref16 = jax.block_until_ready(reference_forward_bf16(
        params, x, edge_index, edge_index_b, LAM, id_new_value_old, edge_weight,
        rw_lmda=RW_LMDA))

    assert out.shape == (N, NUM_CLASSES), out.shape
    # Tight check vs the bf16-matched reference catches any wiring mistake.
    assert jnp.allclose(out, ref16, rtol=2e-3, atol=2e-3), "mismatch vs bf16-matched ref"
    # Looser check vs the full-f32 reference bounds the bf16 quantization error.
    assert jnp.allclose(out, ref32, rtol=3e-2, atol=3e-2), "mismatch vs f32 reference"

    print("KERNEL_OK")
</pallas_src>

<mosaic_0001>
module attributes {stable_mosaic.version = 11 : i64} {
  func.func @_mixup_layer_kernel(%arg0: i32, %arg1: memref<1xf32, #tpu.memory_space<smem>>, %arg2: memref<2x128x128xbf16, #tpu.memory_space<vmem>>, %arg3: memref<128x32xbf16, #tpu.memory_space<vmem>>, %arg4: memref<1x32xf32, #tpu.memory_space<vmem>>, %arg5: memref<32x32xbf16, #tpu.memory_space<vmem>>, %arg6: memref<1x32xf32, #tpu.memory_space<vmem>>, %arg7: memref<128x32xbf16, #tpu.memory_space<vmem>>) attributes {dimension_semantics = [#tpu.dimension_semantics<parallel>], iteration_bounds = array<i64: 1>, scalar_prefetch = 0 : i64, scratch_operands = 0 : i64, tpu.core_type = #tpu.core_type<tc>, window_params = [{transform_indices = @transform_0, window_bounds = array<i64: 1>}, {transform_indices = @transform_1, window_bounds = array<i64: 2, 128, 128>}, {pipeline_mode = #tpu.pipeline_mode<synchronous>, transform_indices = @transform_2, window_bounds = array<i64: 128, 32>}, {pipeline_mode = #tpu.pipeline_mode<synchronous>, transform_indices = @transform_3, window_bounds = array<i64: 1, 32>}, {pipeline_mode = #tpu.pipeline_mode<synchronous>, transform_indices = @transform_4, window_bounds = array<i64: 32, 32>}, {pipeline_mode = #tpu.pipeline_mode<synchronous>, transform_indices = @transform_5, window_bounds = array<i64: 1, 32>}, {transform_indices = @transform_6, window_bounds = array<i64: 128, 32>}]} {
    %c0 = arith.constant 0 : index
    %0 = memref.load %arg1[%c0] : memref<1xf32, #tpu.memory_space<smem>>
    %cst = arith.constant 1.000000e+00 : f32
    %1 = arith.subf %cst, %0 : f32
    %c0_0 = arith.constant 0 : index
    %c0_1 = arith.constant 0 : index
    %2 = vector.load %arg3[%c0_0, %c0_1] : memref<128x32xbf16, #tpu.memory_space<vmem>>, vector<128x32xbf16>
    %c0_2 = arith.constant 0 : index
    %c0_3 = arith.constant 0 : index
    %3 = vector.load %arg4[%c0_2, %c0_3] : memref<1x32xf32, #tpu.memory_space<vmem>>, vector<1x32xf32>
    %c0_4 = arith.constant 0 : index
    %c0_5 = arith.constant 0 : index
    %c0_6 = arith.constant 0 : index
    %4 = vector.load %arg2[%c0_4, %c0_5, %c0_6] : memref<2x128x128xbf16, #tpu.memory_space<vmem>>, vector<2x128x128xbf16>
    %5 = vector.shape_cast %4 : vector<2x128x128xbf16> to vector<256x128xbf16>
    %cst_7 = arith.constant dense<0.000000e+00> : vector<256x32xf32>
    %6 = tpu.matmul %5, %2, %cst_7 {dimension_numbers = #tpu.dot_dimension_numbers<[1], [0], [0], [1], [0, 0, 1, 1], [], []>} : vector<256x128xbf16>, vector<128x32xbf16>, vector<256x32xf32> -> vector<256x32xf32>
    %7 = vector.extract_strided_slice %6 {offsets = [0, 0], sizes = [128, 32], strides = [1, 1]} : vector<256x32xf32> to vector<128x32xf32>
    %8 = vector.broadcast %3 : vector<1x32xf32> to vector<128x32xf32>
    %9 = arith.addf %7, %8 : vector<128x32xf32>
    %cst_8 = arith.constant 0.000000e+00 : f32
    %10 = vector.broadcast %cst_8 : f32 to vector<128x32xf32>
    %11 = arith.maximumf %9, %10 : vector<128x32xf32>
    %12 = vector.extract_strided_slice %6 {offsets = [128, 0], sizes = [128, 32], strides = [1, 1]} : vector<256x32xf32> to vector<128x32xf32>
    %13 = vector.broadcast %3 : vector<1x32xf32> to vector<128x32xf32>
    %14 = arith.addf %12, %13 : vector<128x32xf32>
    %cst_9 = arith.constant 0.000000e+00 : f32
    %15 = vector.broadcast %cst_9 : f32 to vector<128x32xf32>
    %16 = arith.maximumf %14, %15 : vector<128x32xf32>
    %17 = vector.broadcast %0 : f32 to vector<128x32xf32>
    %18 = arith.mulf %17, %11 : vector<128x32xf32>
    %19 = vector.broadcast %1 : f32 to vector<128x32xf32>
    %20 = arith.mulf %19, %16 : vector<128x32xf32>
    %21 = arith.addf %18, %20 : vector<128x32xf32>
    %22 = arith.truncf %21 : vector<128x32xf32> to vector<128x32xbf16>
    %c0_10 = arith.constant 0 : index
    %c0_11 = arith.constant 0 : index
    %23 = vector.load %arg5[%c0_10, %c0_11] : memref<32x32xbf16, #tpu.memory_space<vmem>>, vector<32x32xbf16>
    %cst_12 = arith.constant dense<0.000000e+00> : vector<128x32xf32>
    %24 = tpu.matmul %22, %23, %cst_12 {dimension_numbers = #tpu.dot_dimension_numbers<[1], [0], [0], [1], [0, 0, 1, 1], [], []>} : vector<128x32xbf16>, vector<32x32xbf16>, vector<128x32xf32> -> vector<128x32xf32>
    %c0_13 = arith.constant 0 : index
    %c0_14 = arith.constant 0 : index
    %25 = vector.load %arg6[%c0_13, %c0_14] : memref<1x32xf32, #tpu.memory_space<vmem>>, vector<1x32xf32>
    %26 = vector.broadcast %25 : vector<1x32xf32> to vector<128x32xf32>
    %27 = arith.addf %24, %26 : vector<128x32xf32>
    %28 = arith.truncf %27 : vector<128x32xf32> to vector<128x32xbf16>
    %c0_15 = arith.constant 0 : index
    %c0_16 = arith.constant 0 : index
    %29 = vector.load %arg7[%c0_15, %c0_16] : memref<128x32xbf16, #tpu.memory_space<vmem>>, vector<128x32xbf16>
    tpu.vector_store %arg7[%c0_15, %c0_16], %28 {strides = array<i32>} : memref<128x32xbf16, #tpu.memory_space<vmem>>, vector<128x32xbf16>,
    return
  }
  func.func @transform_0(%arg0: i32) -> i32 {
    %c0_i32 = arith.constant 0 : i32
    %c0_i32_0 = arith.constant 0 : i32
    return %c0_i32 : i32
  }
  func.func @transform_1(%arg0: i32) -> (i32, i32, i32) {
    %c0_i32 = arith.constant 0 : i32
    %c0_i32_0 = arith.constant 0 : i32
    %c0_i32_1 = arith.constant 0 : i32
    return %c0_i32, %arg0, %c0_i32_0 : i32, i32, i32
  }
  func.func @transform_2(%arg0: i32) -> (i32, i32) {
    %c0_i32 = arith.constant 0 : i32
    %c0_i32_0 = arith.constant 0 : i32
    %c0_i32_1 = arith.constant 0 : i32
    return %c0_i32, %c0_i32_0 : i32, i32
  }
  func.func @transform_3(%arg0: i32) -> (i32, i32) {
    %c0_i32 = arith.constant 0 : i32
    %c0_i32_0 = arith.constant 0 : i32
    %c0_i32_1 = arith.constant 0 : i32
    return %c0_i32, %c0_i32_0 : i32, i32
  }
  func.func @transform_4(%arg0: i32) -> (i32, i32) {
    %c0_i32 = arith.constant 0 : i32
    %c0_i32_0 = arith.constant 0 : i32
    %c0_i32_1 = arith.constant 0 : i32
    return %c0_i32, %c0_i32_0 : i32, i32
  }
  func.func @transform_5(%arg0: i32) -> (i32, i32) {
    %c0_i32 = arith.constant 0 : i32
    %c0_i32_0 = arith.constant 0 : i32
    %c0_i32_1 = arith.constant 0 : i32
    return %c0_i32, %c0_i32_0 : i32, i32
  }
  func.func @transform_6(%arg0: i32) -> (i32, i32) {
    %c0_i32 = arith.constant 0 : i32
    %c0_i32_0 = arith.constant 0 : i32
    return %arg0, %c0_i32 : i32, i32
  }
}

</mosaic_0001>

<llo_original>
// kernel: tpu_custom_call.1
$region0: #{tpu_custom_call.1}
  #allocation0 [shape = 'u32[]', space=smem, size = 0x4, offset = 0x4, fixed_abs, tag = 'smem constant byte address 0x4 - core index']
  #allocation1 [shape = 'u32[144,128]{1,0:T(1,128)}', space=vmem, size = 0x12000, scoped, tag = 'internal scratch']
  #allocation2 [shape = 'f32[1]{0:T(128)S(6)}', space=smem, size = 0x200, scoped, tag = 'scoped memory for tpu_custom_call.1']
  %s0 = inlined_call_operand.<no memory space> [shape: f32[1], index: 0, kind: input, shape index: {}]
  %s1 = inlined_call_operand.hbm [shape: bf16[2,128,128], index: 1, kind: input, shape index: {}]
  %s2 = inlined_call_operand.vmem [shape: bf16[128,32], index: 2, kind: input, shape index: {}]
  %s3 = inlined_call_operand.vmem [shape: f32[1,32], index: 3, kind: input, shape index: {}]
  %s4 = inlined_call_operand.vmem [shape: bf16[32,32], index: 4, kind: input, shape index: {}]
  %s5 = inlined_call_operand.vmem [shape: f32[1,32], index: 5, kind: input, shape index: {}]
  %s6 = inlined_call_operand.vmem [shape: bf16[128,32], index: 6, kind: output, shape index: {}]
  %s7 = sld [smem:[#allocation0]]
  $region38: #{tpu_custom_call.1} parent=0
    _
  %s9 = ssub.s32 1, %s7
  %s10 = scalar_select 0, %s9, %s7
  %11 = sst [smem:[#allocation2]] %s0
  $region1: #{tpu_custom_call.1} parent=0
    #allocation3 [shape = 'u8[65536]{0}', space=vmem, size = 0x10000, scoped, tag = 'input window, operand 1, single buffered']
    #allocation4 [shape = 's32[1]{0}', space=sflag, size = 0x4, scoped, tag = 'scoped memory for tpu_custom_call.1']
    %12 = vsyncpa [#allocation4], 0
    // Predicated region
    $region2: #{tpu_custom_call.1} parent=1 // pred_check
      _
    $region3: #{tpu_custom_call.1} parent=1 // pred_check_branch
      %14 = sbr.rel (0) target = $region5
    $region4: #{tpu_custom_call.1} parent=1 // pred_region
      _
    $region5: #{tpu_custom_call.1} parent=1 // pred_fallthru
      _
    // Predicated region
    $region6: #{tpu_custom_call.1} parent=1 // pred_check
      _
    $region7: #{tpu_custom_call.1} parent=1 // pred_check_branch
      %16 = sbr.rel (0) target = $region9
    $region8: #{tpu_custom_call.1} parent=1 // pred_region
      %s18 = ssub.s32 2048, 2048
      %19 = vsyncadd [#allocation4], %s18
      %s20 = sshll.u32 [#allocation3], 4
      %s21 = int_to_ptr.vmem [resolvable:$true] %s20
      %26 = dma.hbm_to_vmem [thread:$0]  %s1, 2048, %s21, [#allocation4], 64, 64, 4
    $region9: #{tpu_custom_call.1} parent=1 // pred_fallthru
      _
    // Predicated region
    $region10: #{tpu_custom_call.1} parent=1 // pred_check
      _
    $region11: #{tpu_custom_call.1} parent=1 // pred_check_branch
      %28 = sbr.rel (0) target = $region13
    $region12: #{tpu_custom_call.1} parent=1 // pred_region
      _
    $region13: #{tpu_custom_call.1} parent=1 // pred_fallthru
      _
    // Predicated region
    $region14: #{tpu_custom_call.1} parent=1 // pred_check
      _
    $region15: #{tpu_custom_call.1} parent=1 // pred_check_branch
      %30 = sbr.rel (0) target = $region17
    $region16: #{tpu_custom_call.1} parent=1 // pred_region
      _
    $region17: #{tpu_custom_call.1} parent=1 // pred_fallthru
      _
    // Predicated region
    $region18: #{tpu_custom_call.1} parent=1 // pred_check
      _
    $region19: #{tpu_custom_call.1} parent=1 // pred_check_branch
      %32 = sbr.rel (0) target = $region21
    $region20: #{tpu_custom_call.1} parent=1 // pred_region
      _
    $region21: #{tpu_custom_call.1} parent=1 // pred_fallthru
      _
    // Predicated region
    $region22: #{tpu_custom_call.1} parent=1 // pred_check
      _
    $region23: #{tpu_custom_call.1} parent=1 // pred_check_branch
      %34 = sbr.rel (0) target = $region25
    $region24: #{tpu_custom_call.1} parent=1 // pred_region
      _
    $region25: #{tpu_custom_call.1} parent=1 // pred_fallthru
      _
    // Predicated region
    $region26: #{tpu_custom_call.1} parent=1 // pred_check
      _
    $region27: #{tpu_custom_call.1} parent=1 // pred_check_branch
      %36 = sbr.rel (0) target = $region29
    $region28: #{tpu_custom_call.1} parent=1 // pred_region
      %37 = dma.done [#allocation4], 2048
    $region29: #{tpu_custom_call.1} parent=1 // pred_fallthru
      _
    %s39 = sld [smem:[#allocation2]]
    %s40 = ssub.f32 1.0, %s39
    %v41 = vld [vmem:[%s2] sm:$0xf]
    %v42 = vld [vmem:[%s2 + $0x4] sm:$0xf]
    %v43 = vld [vmem:[%s2 + $0x8] sm:$0xf]
    %v44 = vld [vmem:[%s2 + $0xc] sm:$0xf]
    %v45 = vld [vmem:[%s2 + $0x10] sm:$0xf]
    %v46 = vld [vmem:[%s2 + $0x14] sm:$0xf]
    %v47 = vld [vmem:[%s2 + $0x18] sm:$0xf]
    %v48 = vld [vmem:[%s2 + $0x1c] sm:$0xf]
    %v49 = vld [vmem:[%s2 + $0x20] sm:$0xf]
    %v50 = vld [vmem:[%s2 + $0x24] sm:$0xf]
    %v51 = vld [vmem:[%s2 + $0x28] sm:$0xf]
    %v52 = vld [vmem:[%s2 + $0x2c] sm:$0xf]
    %v53 = vld [vmem:[%s2 + $0x30] sm:$0xf]
    %v54 = vld [vmem:[%s2 + $0x34] sm:$0xf]
    %v55 = vld [vmem:[%s2 + $0x38] sm:$0xf]
    %v56 = vld [vmem:[%s2 + $0x3c] sm:$0xf]
    %v57 = vld [vmem:[%s3] sm:$0x1]
    %v58 = vld [vmem:[#allocation3] sm:$0xf]
    %v59 = vld [vmem:[#allocation3 + $0x4] sm:$0xf]
    %v60 = vld [vmem:[#allocation3 + $0x8] sm:$0xf]
    %v61 = vld [vmem:[#allocation3 + $0xc] sm:$0xf]
    %v62 = vld [vmem:[#allocation3 + $0x10] sm:$0xf]
    %v63 = vld [vmem:[#allocation3 + $0x14] sm:$0xf]
    %v64 = vld [vmem:[#allocation3 + $0x18] sm:$0xf]
    %v65 = vld [vmem:[#allocation3 + $0x1c] sm:$0xf]
    %v66 = vld [vmem:[#allocation3 + $0x20] sm:$0xf]
    %v67 = vld [vmem:[#allocation3 + $0x24] sm:$0xf]
    %v68 = vld [vmem:[#allocation3 + $0x28] sm:$0xf]
    %v69 = vld [vmem:[#allocation3 + $0x2c] sm:$0xf]
    %v70 = vld [vmem:[#allocation3 + $0x30] sm:$0xf]
    %v71 = vld [vmem:[#allocation3 + $0x34] sm:$0xf]
    %v72 = vld [vmem:[#allocation3 + $0x38] sm:$0xf]
    %v73 = vld [vmem:[#allocation3 + $0x3c] sm:$0xf]
    %v74 = vld [vmem:[#allocation3 + $0x40] sm:$0xf]
    %v75 = vld [vmem:[#allocation3 + $0x44] sm:$0xf]
    %v76 = vld [vmem:[#allocation3 + $0x48] sm:$0xf]
    %v77 = vld [vmem:[#allocation3 + $0x4c] sm:$0xf]
    %v78 = vld [vmem:[#allocation3 + $0x50] sm:$0xf]
    %v79 = vld [vmem:[#allocation3 + $0x54] sm:$0xf]
    %v80 = vld [vmem:[#allocation3 + $0x58] sm:$0xf]
    %v81 = vld [vmem:[#allocation3 + $0x5c] sm:$0xf]
    %v82 = vld [vmem:[#allocation3 + $0x60] sm:$0xf]
    %v83 = vld [vmem:[#allocation3 + $0x64] sm:$0xf]
    %v84 = vld [vmem:[#allocation3 + $0x68] sm:$0xf]
    %v85 = vld [vmem:[#allocation3 + $0x6c] sm:$0xf]
    %v86 = vld [vmem:[#allocation3 + $0x70] sm:$0xf]
    %v87 = vld [vmem:[#allocation3 + $0x74] sm:$0xf]
    %v88 = vld [vmem:[#allocation3 + $0x78] sm:$0xf]
    %v89 = vld [vmem:[#allocation3 + $0x7c] sm:$0xf]
    %v122 = vunpack.c.l.b16 %v58
    %v123 = vunpack.c.l.b16 %v59
    %v124 = vunpack.c.l.b16 %v60
    %v125 = vunpack.c.l.b16 %v61
    %v126 = vunpack.c.l.b16 %v62
    %v127 = vunpack.c.l.b16 %v63
    %v128 = vunpack.c.l.b16 %v64
    %v129 = vunpack.c.l.b16 %v65
    %v130 = vunpack.c.l.b16 %v66
    %v131 = vunpack.c.l.b16 %v67
    %v132 = vunpack.c.l.b16 %v68
    %v133 = vunpack.c.l.b16 %v69
    %v134 = vunpack.c.l.b16 %v70
    %v135 = vunpack.c.l.b16 %v71
    %v136 = vunpack.c.l.b16 %v72
    %v137 = vunpack.c.l.b16 %v73
    %v138 = vunpack.c.l.b16 %v74
    %v139 = vunpack.c.l.b16 %v75
    %v140 = vunpack.c.l.b16 %v76
    %v141 = vunpack.c.l.b16 %v77
    %v142 = vunpack.c.l.b16 %v78
    %v143 = vunpack.c.l.b16 %v79
    %v144 = vunpack.c.l.b16 %v80
    %v145 = vunpack.c.l.b16 %v81
    %v146 = vunpack.c.l.b16 %v82
    %v147 = vunpack.c.l.b16 %v83
    %v148 = vunpack.c.l.b16 %v84
    %v149 = vunpack.c.l.b16 %v85
    %v150 = vunpack.c.l.b16 %v86
    %v151 = vunpack.c.l.b16 %v87
    %v152 = vunpack.c.l.b16 %v88
    %v153 = vunpack.c.l.b16 %v89
    %v154 = vpack.c.b16 %v123, %v122
    %v155 = vpack.c.b16 %v125, %v124
    %v156 = vpack.c.b16 %v127, %v126
    %v157 = vpack.c.b16 %v129, %v128
    %v158 = vpack.c.b16 %v131, %v130
    %v159 = vpack.c.b16 %v133, %v132
    %v160 = vpack.c.b16 %v135, %v134
    %v161 = vpack.c.b16 %v137, %v136
    %v162 = vpack.c.b16 %v139, %v138
    %v163 = vpack.c.b16 %v141, %v140
    %v164 = vpack.c.b16 %v143, %v142
    %v165 = vpack.c.b16 %v145, %v144
    %v166 = vpack.c.b16 %v147, %v146
    %v167 = vpack.c.b16 %v149, %v148
    %v168 = vpack.c.b16 %v151, %v150
    %v169 = vpack.c.b16 %v153, %v152
    %v202 = vunpack.c.l.b16 %v41
    %v203 = vunpack.c.l.b16 %v42
    %v204 = vunpack.c.l.b16 %v43
    %v205 = vunpack.c.l.b16 %v44
    %v206 = vunpack.c.l.b16 %v45
    %v207 = vunpack.c.l.b16 %v46
    %v208 = vunpack.c.l.b16 %v47
    %v209 = vunpack.c.l.b16 %v48
    %v210 = vunpack.c.l.b16 %v49
    %v211 = vunpack.c.l.b16 %v50
    %v212 = vunpack.c.l.b16 %v51
    %v213 = vunpack.c.l.b16 %v52
    %v214 = vunpack.c.l.b16 %v53
    %v215 = vunpack.c.l.b16 %v54
    %v216 = vunpack.c.l.b16 %v55
    %v217 = vunpack.c.l.b16 %v56
    %v218 = vpack.c.b16 %v203, %v202
    %v219 = vpack.c.b16 %v205, %v204
    %v220 = vpack.c.b16 %v207, %v206
    %v221 = vpack.c.b16 %v209, %v208
    %v222 = vpack.c.b16 %v211, %v210
    %v223 = vpack.c.b16 %v213, %v212
    %v224 = vpack.c.b16 %v215, %v214
    %v225 = vpack.c.b16 %v217, %v216
    %234 = vmatprep.subr.bf16.mxu0 0
    %235 = vmatpush1.bf16.msra.mxu0 %v218
    %236 = vmatprep.subr.bf16.mxu0 0
    %237 = vmatpush1.bf16.msra.mxu0 %v219
    %238 = vmatprep.subr.bf16.mxu0 0
    %239 = vmatpush1.bf16.msra.mxu0 %v220
    %240 = vmatprep.subr.bf16.mxu0 0
    %241 = vmatpush1.bf16.msra.mxu0 %v221
    %242 = vmatprep.subr.bf16.mxu0 0
    %243 = vmatpush1.bf16.msra.mxu0 %v222
    %244 = vmatprep.subr.bf16.mxu0 0
    %245 = vmatpush1.bf16.msra.mxu0 %v223
    %246 = vmatprep.subr.bf16.mxu0 0
    %247 = vmatpush1.bf16.msra.mxu0 %v224
    %248 = vmatprep.subr.bf16.mxu0 0
    %249 = vmatpush1.bf16.msra.mxu0 %v225
    %250 = vmatprep.subr.bf16.mxu0 0
    %251 = vmatpush1.bf16.msra.mxu0 0
    %252 = vmatprep.subr.bf16.mxu0 0
    %253 = vmatpush1.bf16.msra.mxu0 0
    %254 = vmatprep.subr.bf16.mxu0 0
    %255 = vmatpush1.bf16.msra.mxu0 0
    %256 = vmatprep.subr.bf16.mxu0 0
    %257 = vmatpush1.bf16.msra.mxu0 0
    %258 = vmatprep.subr.bf16.mxu0 0
    %259 = vmatpush1.bf16.msra.mxu0 0
    %260 = vmatprep.subr.bf16.mxu0 0
    %261 = vmatpush1.bf16.msra.mxu0 0
    %262 = vmatprep.subr.bf16.mxu0 0
    %263 = vmatpush1.bf16.msra.mxu0 0
    %264 = vmatprep.subr.bf16.mxu0 0
    %265 = vmatpush1.bf16.msra.mxu0 0
    %266 = vmatprep.mubr.bf16.mxu0 0
    %267 = vmatmul.mubr.bf16.gmra.mrb[0].mxu0 %v154
    %v268 = vpop.f32.mrb[0].mxu0
    %v269 = vadd.f32 0.0, %v268
    %v270 = vpop.f32.mrb[0].mxu0
    %v271 = vpop.f32.mrb[0].mxu0
    %v272 = vadd.f32 0.0, %v271
    %v273 = vpop.f32.mrb[0].mxu0
    %274 = vmatprep.mubr.bf16.mxu0 0
    %275 = vmatmul.mubr.bf16.gmra.mrb[0].mxu0 %v155
    %v276 = vpop.f32.mrb[0].mxu0
    %v277 = vadd.f32 0.0, %v276
    %v278 = vpop.f32.mrb[0].mxu0
    %v279 = vpop.f32.mrb[0].mxu0
    %v280 = vadd.f32 0.0, %v279
    %v281 = vpop.f32.mrb[0].mxu0
    %282 = vmatprep.mubr.bf16.mxu0 0
    %283 = vmatmul.mubr.bf16.gmra.mrb[0].mxu0 %v156
    %v284 = vpop.f32.mrb[0].mxu0
    %v285 = vadd.f32 0.0, %v284
    %v286 = vpop.f32.mrb[0].mxu0
    %v287 = vpop.f32.mrb[0].mxu0
    %v288 = vadd.f32 0.0, %v287
    %v289 = vpop.f32.mrb[0].mxu0
    %290 = vmatprep.mubr.bf16.mxu0 0
    %291 = vmatmul.mubr.bf16.gmra.mrb[0].mxu0 %v157
    %v292 = vpop.f32.mrb[0].mxu0
    %v293 = vadd.f32 0.0, %v292
    %v294 = vpop.f32.mrb[0].mxu0
    %v295 = vpop.f32.mrb[0].mxu0
    %v296 = vadd.f32 0.0, %v295
    %v297 = vpop.f32.mrb[0].mxu0
    %298 = vmatprep.mubr.bf16.mxu0 0
    %299 = vmatmul.mubr.bf16.gmra.mrb[0].mxu0 %v158
    %v300 = vpop.f32.mrb[0].mxu0
    %v301 = vadd.f32 0.0, %v300
    %v302 = vpop.f32.mrb[0].mxu0
    %v303 = vpop.f32.mrb[0].mxu0
    %v304 = vadd.f32 0.0, %v303
    %v305 = vpop.f32.mrb[0].mxu0
    %306 = vmatprep.mubr.bf16.mxu0 0
    %307 = vmatmul.mubr.bf16.gmra.mrb[0].mxu0 %v159
    %v308 = vpop.f32.mrb[0].mxu0
    %v309 = vadd.f32 0.0, %v308
    %v310 = vpop.f32.mrb[0].mxu0
    %v311 = vpop.f32.mrb[0].mxu0
    %v312 = vadd.f32 0.0, %v311
    %v313 = vpop.f32.mrb[0].mxu0
    %314 = vmatprep.mubr.bf16.mxu0 0
    %315 = vmatmul.mubr.bf16.gmra.mrb[0].mxu0 %v160
    %v316 = vpop.f32.mrb[0].mxu0
    %v317 = vadd.f32 0.0, %v316
    %v318 = vpop.f32.mrb[0].mxu0
    %v319 = vpop.f32.mrb[0].mxu0
    %v320 = vadd.f32 0.0, %v319
    %v321 = vpop.f32.mrb[0].mxu0
    %322 = vmatprep.mubr.bf16.mxu0 0
    %323 = vmatmul.mubr.bf16.gmra.mrb[0].mxu0 %v161
    %v324 = vpop.f32.mrb[0].mxu0
    %v325 = vadd.f32 0.0, %v324
    %v326 = vpop.f32.mrb[0].mxu0
    %v327 = vpop.f32.mrb[0].mxu0
    %v328 = vadd.f32 0.0, %v327
    %v329 = vpop.f32.mrb[0].mxu0
    %330 = vmatprep.mubr.bf16.mxu0 0
    %331 = vmatmul.mubr.bf16.gmra.mrb[0].mxu0 %v162
    %v332 = vpop.f32.mrb[0].mxu0
    %v333 = vadd.f32 0.0, %v332
    %v334 = vpop.f32.mrb[0].mxu0
    %v335 = vpop.f32.mrb[0].mxu0
    %v336 = vadd.f32 0.0, %v335
    %v337 = vpop.f32.mrb[0].mxu0
    %338 = vmatprep.mubr.bf16.mxu0 0
    %339 = vmatmul.mubr.bf16.gmra.mrb[0].mxu0 %v163
    %v340 = vpop.f32.mrb[0].mxu0
    %v341 = vadd.f32 0.0, %v340
    %v342 = vpop.f32.mrb[0].mxu0
    %v343 = vpop.f32.mrb[0].mxu0
    %v344 = vadd.f32 0.0, %v343
    %v345 = vpop.f32.mrb[0].mxu0
    %346 = vmatprep.mubr.bf16.mxu0 0
    %347 = vmatmul.mubr.bf16.gmra.mrb[0].mxu0 %v164
    %v348 = vpop.f32.mrb[0].mxu0
    %v349 = vadd.f32 0.0, %v348
    %v350 = vpop.f32.mrb[0].mxu0
    %v351 = vpop.f32.mrb[0].mxu0
    %v352 = vadd.f32 0.0, %v351
    %v353 = vpop.f32.mrb[0].mxu0
    %354 = vmatprep.mubr.bf16.mxu0 0
    %355 = vmatmul.mubr.bf16.gmra.mrb[0].mxu0 %v165
    %v356 = vpop.f32.mrb[0].mxu0
    %v357 = vadd.f32 0.0, %v356
    %v358 = vpop.f32.mrb[0].mxu0
    %v359 = vpop.f32.mrb[0].mxu0
    %v360 = vadd.f32 0.0, %v359
    %v361 = vpop.f32.mrb[0].mxu0
    %362 = vmatprep.mubr.bf16.mxu0 0
    %363 = vmatmul.mubr.bf16.gmra.mrb[0].mxu0 %v166
    %v364 = vpop.f32.mrb[0].mxu0
    %v365 = vadd.f32 0.0, %v364
    %v366 = vpop.f32.mrb[0].mxu0
    %v367 = vpop.f32.mrb[0].mxu0
    %v368 = vadd.f32 0.0, %v367
    %v369 = vpop.f32.mrb[0].mxu0
    %370 = vmatprep.mubr.bf16.mxu0 0
    %371 = vmatmul.mubr.bf16.gmra.mrb[0].mxu0 %v167
    %v372 = vpop.f32.mrb[0].mxu0
    %v373 = vadd.f32 0.0, %v372
    %v374 = vpop.f32.mrb[0].mxu0
    %v375 = vpop.f32.mrb[0].mxu0
    %v376 = vadd.f32 0.0, %v375
    %v377 = vpop.f32.mrb[0].mxu0
    %378 = vmatprep.mubr.bf16.mxu0 0
    %379 = vmatmul.mubr.bf16.gmra.mrb[0].mxu0 %v168
    %v380 = vpop.f32.mrb[0].mxu0
    %v381 = vadd.f32 0.0, %v380
    %v382 = vpop.f32.mrb[0].mxu0
    %v383 = vpop.f32.mrb[0].mxu0
    %v384 = vadd.f32 0.0, %v383
    %v385 = vpop.f32.mrb[0].mxu0
    %386 = vmatprep.mubr.bf16.mxu0 0
    %387 = vmatmul.mubr.bf16.gmra.mrb[0].mxu0 %v169
    %v388 = vpop.f32.mrb[0].mxu0
    %v389 = vadd.f32 0.0, %v388
    %v390 = vpop.f32.mrb[0].mxu0
    %v391 = vpop.f32.mrb[0].mxu0
    %v392 = vadd.f32 0.0, %v391
    %v393 = vpop.f32.mrb[0].mxu0
    %394 = vdwg.mxu0
    %v396 = vlaneseq
    %v397 = vshrl.u32 %v396, 7
    %v398 = vsub.s32 0, %v397
    %v399 = vrot.slane %v57, %v398
    %v401 = vadd.f32 %v269, %v399
    %v402 = vadd.f32 %v272, %v399
    %v403 = vadd.f32 %v277, %v399
    %v404 = vadd.f32 %v280, %v399
    %v405 = vadd.f32 %v285, %v399
    %v406 = vadd.f32 %v288, %v399
    %v407 = vadd.f32 %v293, %v399
    %v408 = vadd.f32 %v296, %v399
    %v409 = vadd.f32 %v301, %v399
    %v410 = vadd.f32 %v304, %v399
    %v411 = vadd.f32 %v309, %v399
    %v412 = vadd.f32 %v312, %v399
    %v413 = vadd.f32 %v317, %v399
    %v414 = vadd.f32 %v320, %v399
    %v415 = vadd.f32 %v325, %v399
    %v416 = vadd.f32 %v328, %v399
    %v417 = vmax.f32 %v401, 0.0
    %v418 = vmax.f32 %v402, 0.0
    %v419 = vmax.f32 %v403, 0.0
    %v420 = vmax.f32 %v404, 0.0
    %v421 = vmax.f32 %v405, 0.0
    %v422 = vmax.f32 %v406, 0.0
    %v423 = vmax.f32 %v407, 0.0
    %v424 = vmax.f32 %v408, 0.0
    %v425 = vmax.f32 %v409, 0.0
    %v426 = vmax.f32 %v410, 0.0
    %v427 = vmax.f32 %v411, 0.0
    %v428 = vmax.f32 %v412, 0.0
    %v429 = vmax.f32 %v413, 0.0
    %v430 = vmax.f32 %v414, 0.0
    %v431 = vmax.f32 %v415, 0.0
    %v432 = vmax.f32 %v416, 0.0
    %v433 = vadd.f32 %v333, %v399
    %v434 = vadd.f32 %v336, %v399
    %v435 = vadd.f32 %v341, %v399
    %v436 = vadd.f32 %v344, %v399
    %v437 = vadd.f32 %v349, %v399
    %v438 = vadd.f32 %v352, %v399
    %v439 = vadd.f32 %v357, %v399
    %v440 = vadd.f32 %v360, %v399
    %v441 = vadd.f32 %v365, %v399
    %v442 = vadd.f32 %v368, %v399
    %v443 = vadd.f32 %v373, %v399
    %v444 = vadd.f32 %v376, %v399
    %v445 = vadd.f32 %v381, %v399
    %v446 = vadd.f32 %v384, %v399
    %v447 = vadd.f32 %v389, %v399
    %v448 = vadd.f32 %v392, %v399
    %v449 = vmax.f32 %v433, 0.0
    %v450 = vmax.f32 %v434, 0.0
    %v451 = vmax.f32 %v435, 0.0
    %v452 = vmax.f32 %v436, 0.0
    %v453 = vmax.f32 %v437, 0.0
    %v454 = vmax.f32 %v438, 0.0
    %v455 = vmax.f32 %v439, 0.0
    %v456 = vmax.f32 %v440, 0.0
    %v457 = vmax.f32 %v441, 0.0
    %v458 = vmax.f32 %v442, 0.0
    %v459 = vmax.f32 %v443, 0.0
    %v460 = vmax.f32 %v444, 0.0
    %v461 = vmax.f32 %v445, 0.0
    %v462 = vmax.f32 %v446, 0.0
    %v463 = vmax.f32 %v447, 0.0
    %v464 = vmax.f32 %v448, 0.0
    %v465 = vstv %s39
    %v466 = vmul.f32 %v465, %v417
    %v467 = vmul.f32 %v465, %v418
    %v468 = vmul.f32 %v465, %v419
    %v469 = vmul.f32 %v465, %v420
    %v470 = vmul.f32 %v465, %v421
    %v471 = vmul.f32 %v465, %v422
    %v472 = vmul.f32 %v465, %v423
    %v473 = vmul.f32 %v465, %v424
    %v474 = vmul.f32 %v465, %v425
    %v475 = vmul.f32 %v465, %v426
    %v476 = vmul.f32 %v465, %v427
    %v477 = vmul.f32 %v465, %v428
    %v478 = vmul.f32 %v465, %v429
    %v479 = vmul.f32 %v465, %v430
    %v480 = vmul.f32 %v465, %v431
    %v481 = vmul.f32 %v465, %v432
    %v482 = vstv %s40
    %v483 = vmul.f32 %v482, %v449
    %v484 = vmul.f32 %v482, %v450
    %v485 = vmul.f32 %v482, %v451
    %v486 = vmul.f32 %v482, %v452
    %v487 = vmul.f32 %v482, %v453
    %v488 = vmul.f32 %v482, %v454
    %v489 = vmul.f32 %v482, %v455
    %v490 = vmul.f32 %v482, %v456
    %v491 = vmul.f32 %v482, %v457
    %v492 = vmul.f32 %v482, %v458
    %v493 = vmul.f32 %v482, %v459
    %v494 = vmul.f32 %v482, %v460
    %v495 = vmul.f32 %v482, %v461
    %v496 = vmul.f32 %v482, %v462
    %v497 = vmul.f32 %v482, %v463
    %v498 = vmul.f32 %v482, %v464
    %v499 = vadd.f32 %v466, %v483
    %v500 = vadd.f32 %v467, %v484
    %v501 = vadd.f32 %v468, %v485
    %v502 = vadd.f32 %v469, %v486
    %v503 = vadd.f32 %v470, %v487
    %v504 = vadd.f32 %v471, %v488
    %v505 = vadd.f32 %v472, %v489
    %v506 = vadd.f32 %v473, %v490
    %v507 = vadd.f32 %v474, %v491
    %v508 = vadd.f32 %v475, %v492
    %v509 = vadd.f32 %v476, %v493
    %v510 = vadd.f32 %v477, %v494
    %v511 = vadd.f32 %v478, %v495
    %v512 = vadd.f32 %v479, %v496
    %v513 = vadd.f32 %v480, %v497
    %v514 = vadd.f32 %v481, %v498
    %v515 = vpack.c.bf16 %v500, %v499
    %v516 = vpack.c.bf16 %v502, %v501
    %v517 = vpack.c.bf16 %v504, %v503
    %v518 = vpack.c.bf16 %v506, %v505
    %v519 = vpack.c.bf16 %v508, %v507
    %v520 = vpack.c.bf16 %v510, %v509
    %v521 = vpack.c.bf16 %v512, %v511
    %v522 = vpack.c.bf16 %v514, %v513
    %v523 = vld [vmem:[%s4] sm:$0xf]
    %v524 = vld [vmem:[%s4 + $0x4] sm:$0xf]
    %v525 = vld [vmem:[%s4 + $0x8] sm:$0xf]
    %v526 = vld [vmem:[%s4 + $0xc] sm:$0xf]
    %v527 = vld [vmem:[%s5] sm:$0x1]
    %v529 = vlaneseq
    %v530 = vshrl.u32 %v529, 7
    %v531 = vsub.s32 0, %v530
    %v532 = vrot.slane %v527, %v531
    %v538 = vunpack.c.l.b16 %v523
    %v539 = vunpack.c.l.b16 %v524
    %v540 = vunpack.c.l.b16 %v525
    %v541 = vunpack.c.l.b16 %v526
    %v542 = vpack.c.b16 %v539, %v538
    %v543 = vpack.c.b16 %v541, %v540
    %vm546 = vcmask 261120
    %v548 = vsel %vm546, %v515, 0
    %v551 = vsel %vm546, %v516, 0
    %v554 = vsel %vm546, %v517, 0
    %v557 = vsel %vm546, %v518, 0
    %v560 = vsel %vm546, %v519, 0
    %v563 = vsel %vm546, %v520, 0
    %v566 = vsel %vm546, %v521, 0
    %v569 = vsel %vm546, %v522, 0
    %571 = vmatprep.subr.bf16.mxu0 0
    %572 = vmatpush1.bf16.msra.mxu0 %v542
    %573 = vmatprep.subr.bf16.mxu0 0
    %574 = vmatpush1.bf16.msra.mxu0 %v543
    %575 = vmatprep.subr.bf16.mxu0 0
    %576 = vmatpush1.bf16.msra.mxu0 0
    %577 = vmatprep.subr.bf16.mxu0 0
    %578 = vmatpush1.bf16.msra.mxu0 0
    %579 = vmatprep.subr.bf16.mxu0 0
    %580 = vmatpush1.bf16.msra.mxu0 0
    %581 = vmatprep.subr.bf16.mxu0 0
    %582 = vmatpush1.bf16.msra.mxu0 0
    %583 = vmatprep.subr.bf16.mxu0 0
    %584 = vmatpush1.bf16.msra.mxu0 0
    %585 = vmatprep.subr.bf16.mxu0 0
    %586 = vmatpush1.bf16.msra.mxu0 0
    %587 = vmatprep.subr.bf16.mxu0 0
    %588 = vmatpush1.bf16.msra.mxu0 0
    %589 = vmatprep.subr.bf16.mxu0 0
    %590 = vmatpush1.bf16.msra.mxu0 0
    %591 = vmatprep.subr.bf16.mxu0 0
    %592 = vmatpush1.bf16.msra.mxu0 0
    %593 = vmatprep.subr.bf16.mxu0 0
    %594 = vmatpush1.bf16.msra.mxu0 0
    %595 = vmatprep.subr.bf16.mxu0 0
    %596 = vmatpush1.bf16.msra.mxu0 0
    %597 = vmatprep.subr.bf16.mxu0 0
    %598 = vmatpush1.bf16.msra.mxu0 0
    %599 = vmatprep.subr.bf16.mxu0 0
    %600 = vmatpush1.bf16.msra.mxu0 0
    %601 = vmatprep.subr.bf16.mxu0 0
    %602 = vmatpush1.bf16.msra.mxu0 0
    %603 = vmatprep.mubr.bf16.mxu0 0
    %604 = vmatmul.mubr.bf16.gmra.mrb[0].mxu0 %v548
    %v605 = vpop.f32.mrb[0].mxu0
    %v606 = vadd.f32 %v532, %v605
    %v607 = vpop.f32.mrb[0].mxu0
    %v608 = vpop.f32.mrb[0].mxu0
    %v609 = vadd.f32 %v532, %v608
    %v610 = vpop.f32.mrb[0].mxu0
    %611 = vmatprep.mubr.bf16.mxu0 0
    %612 = vmatmul.mubr.bf16.gmra.mrb[0].mxu0 %v551
    %v613 = vpop.f32.mrb[0].mxu0
    %v614 = vadd.f32 %v532, %v613
    %v615 = vpop.f32.mrb[0].mxu0
    %v616 = vpop.f32.mrb[0].mxu0
    %v617 = vadd.f32 %v532, %v616
    %v618 = vpop.f32.mrb[0].mxu0
    %619 = vmatprep.mubr.bf16.mxu0 0
    %620 = vmatmul.mubr.bf16.gmra.mrb[0].mxu0 %v554
    %v621 = vpop.f32.mrb[0].mxu0
    %v622 = vadd.f32 %v532, %v621
    %v623 = vpop.f32.mrb[0].mxu0
    %v624 = vpop.f32.mrb[0].mxu0
    %v625 = vadd.f32 %v532, %v624
    %v626 = vpop.f32.mrb[0].mxu0
    %627 = vmatprep.mubr.bf16.mxu0 0
    %628 = vmatmul.mubr.bf16.gmra.mrb[0].mxu0 %v557
    %v629 = vpop.f32.mrb[0].mxu0
    %v630 = vadd.f32 %v532, %v629
    %v631 = vpop.f32.mrb[0].mxu0
    %v632 = vpop.f32.mrb[0].mxu0
    %v633 = vadd.f32 %v532, %v632
    %v634 = vpop.f32.mrb[0].mxu0
    %635 = vmatprep.mubr.bf16.mxu0 0
    %636 = vmatmul.mubr.bf16.gmra.mrb[0].mxu0 %v560
    %v637 = vpop.f32.mrb[0].mxu0
    %v638 = vadd.f32 %v532, %v637
    %v639 = vpop.f32.mrb[0].mxu0
    %v640 = vpop.f32.mrb[0].mxu0
    %v641 = vadd.f32 %v532, %v640
    %v642 = vpop.f32.mrb[0].mxu0
    %643 = vmatprep.mubr.bf16.mxu0 0
    %644 = vmatmul.mubr.bf16.gmra.mrb[0].mxu0 %v563
    %v645 = vpop.f32.mrb[0].mxu0
    %v646 = vadd.f32 %v532, %v645
    %v647 = vpop.f32.mrb[0].mxu0
    %v648 = vpop.f32.mrb[0].mxu0
    %v649 = vadd.f32 %v532, %v648
    %v650 = vpop.f32.mrb[0].mxu0
    %651 = vmatprep.mubr.bf16.mxu0 0
    %652 = vmatmul.mubr.bf16.gmra.mrb[0].mxu0 %v566
    %v653 = vpop.f32.mrb[0].mxu0
    %v654 = vadd.f32 %v532, %v653
    %v655 = vpop.f32.mrb[0].mxu0
    %v656 = vpop.f32.mrb[0].mxu0
    %v657 = vadd.f32 %v532, %v656
    %v658 = vpop.f32.mrb[0].mxu0
    %659 = vmatprep.mubr.bf16.mxu0 0
    %660 = vmatmul.mubr.bf16.gmra.mrb[0].mxu0 %v569
    %v661 = vpop.f32.mrb[0].mxu0
    %v662 = vadd.f32 %v532, %v661
    %v663 = vpop.f32.mrb[0].mxu0
    %v664 = vpop.f32.mrb[0].mxu0
    %v665 = vadd.f32 %v532, %v664
    %v666 = vpop.f32.mrb[0].mxu0
    %667 = vdwg.mxu0
    %v668 = vpack.c.bf16 %v609, %v606
    %v669 = vpack.c.bf16 %v617, %v614
    %v670 = vpack.c.bf16 %v625, %v622
    %v671 = vpack.c.bf16 %v633, %v630
    %v672 = vpack.c.bf16 %v641, %v638
    %v673 = vpack.c.bf16 %v649, %v646
    %v674 = vpack.c.bf16 %v657, %v654
    %v675 = vpack.c.bf16 %v665, %v662
    %v684 = vunpack.c.l.b16 %v668
    %v685 = vunpack.c.h.b16 %v668
    %v686 = vunpack.c.l.b16 %v669
    %v687 = vunpack.c.h.b16 %v669
    %v688 = vunpack.c.l.b16 %v670
    %v689 = vunpack.c.h.b16 %v670
    %v690 = vunpack.c.l.b16 %v671
    %v691 = vunpack.c.h.b16 %v671
    %v692 = vunpack.c.l.b16 %v672
    %v693 = vunpack.c.h.b16 %v672
    %v694 = vunpack.c.l.b16 %v673
    %v695 = vunpack.c.h.b16 %v673
    %v696 = vunpack.c.l.b16 %v674
    %v697 = vunpack.c.h.b16 %v674
    %v698 = vunpack.c.l.b16 %v675
    %v699 = vunpack.c.h.b16 %v675
    %v700 = vpack.c.b16 %v684, %v684
    %v701 = vpack.c.b16 %v685, %v685
    %v702 = vpack.c.b16 %v686, %v686
    %v703 = vpack.c.b16 %v687, %v687
    %v704 = vpack.c.b16 %v688, %v688
    %v705 = vpack.c.b16 %v689, %v689
    %v706 = vpack.c.b16 %v690, %v690
    %v707 = vpack.c.b16 %v691, %v691
    %v708 = vpack.c.b16 %v692, %v692
    %v709 = vpack.c.b16 %v693, %v693
    %v710 = vpack.c.b16 %v694, %v694
    %v711 = vpack.c.b16 %v695, %v695
    %v712 = vpack.c.b16 %v696, %v696
    %v713 = vpack.c.b16 %v697, %v697
    %v714 = vpack.c.b16 %v698, %v698
    %v715 = vpack.c.b16 %v699, %v699
    %vm732 = vcmask 257024
    %733 = vst.msk [vmem:[%s6] sm:$0xf] %vm732, %v700
    %734 = vst.msk [vmem:[%s6 + $0x4] sm:$0xf] %vm732, %v701
    %735 = vst.msk [vmem:[%s6 + $0x8] sm:$0xf] %vm732, %v702
    %736 = vst.msk [vmem:[%s6 + $0xc] sm:$0xf] %vm732, %v703
    %737 = vst.msk [vmem:[%s6 + $0x10] sm:$0xf] %vm732, %v704
    %738 = vst.msk [vmem:[%s6 + $0x14] sm:$0xf] %vm732, %v705
    %739 = vst.msk [vmem:[%s6 + $0x18] sm:$0xf] %vm732, %v706
    %740 = vst.msk [vmem:[%s6 + $0x1c] sm:$0xf] %vm732, %v707
    %741 = vst.msk [vmem:[%s6 + $0x20] sm:$0xf] %vm732, %v708
    %742 = vst.msk [vmem:[%s6 + $0x24] sm:$0xf] %vm732, %v709
    %743 = vst.msk [vmem:[%s6 + $0x28] sm:$0xf] %vm732, %v710
    %744 = vst.msk [vmem:[%s6 + $0x2c] sm:$0xf] %vm732, %v711
    %745 = vst.msk [vmem:[%s6 + $0x30] sm:$0xf] %vm732, %v712
    %746 = vst.msk [vmem:[%s6 + $0x34] sm:$0xf] %vm732, %v713
    %747 = vst.msk [vmem:[%s6 + $0x38] sm:$0xf] %vm732, %v714
    %748 = vst.msk [vmem:[%s6 + $0x3c] sm:$0xf] %vm732, %v715
    // Predicated region
    $region30: #{tpu_custom_call.1} parent=1 // pred_check
      _
    $region31: #{tpu_custom_call.1} parent=1 // pred_check_branch
      %750 = sbr.rel (0) target = $region33
    $region32: #{tpu_custom_call.1} parent=1 // pred_region
      _
    $region33: #{tpu_custom_call.1} parent=1 // pred_fallthru
      _
    // Predicated region
    $region34: #{tpu_custom_call.1} parent=1 // pred_check
      _
    $region35: #{tpu_custom_call.1} parent=1 // pred_check_branch
      %752 = sbr.rel (0) target = $region37
    $region36: #{tpu_custom_call.1} parent=1 // pred_region
      _
    $region37: #{tpu_custom_call.1} parent=1 // pred_fallthru
      _
    %753 = vsyncpa [#allocation4], 1

</llo_original>
